<compile_context>
chip_gen: v7x
topology: tpu7x:2x2x1
jax: 0.10.0
libtpu: 0.0.40
codegen_flags: <defaults>
</compile_context>

<pallas_src>
import functools

import jax
import jax.numpy as jnp
from jax.experimental import pallas as pl
from jax.experimental.pallas import tpu as pltpu


def linear_kernel(x_ref, w_ref, b_ref, o_ref):
    # x_ref: (TB, IN)  natural [batch, feature] layout (IN on the lane axis)
    # w_ref: (1,  IN)  weight row, VMEM-resident
    # b_ref: (1,  1)   scalar bias in SMEM
    # o_ref: (TB, 1)
    prod = x_ref[...] * w_ref[...]                 # VPU multiply, sublane-broadcast weight
    acc = jnp.sum(prod, axis=-1, keepdims=True)    # XLU lane reduce -> (TB, 1)
    o_ref[...] = (acc + b_ref[0, 0]).astype(o_ref.dtype)


@functools.partial(jax.jit, static_argnames=("tb", "core_parallel"))
def linear_pallas(x, w, b, *, tb=16384, core_parallel=False):
    """x: [B, IN] f32, w: [OUT(=1), IN] f32, b: [1, 1] f32 -> [B, OUT] f32."""
    B, IN = x.shape
    OUT = w.shape[0]

    # Batch tiling on the sublane axis.  No transpose / pad of x; the edge
    # block (when B % TB != 0) is read/written with Pallas's built-in masking
    # and is safe because the reduction is along the fully in-bounds IN axis.
    TB = B if B <= tb else tb
    grid = (pl.cdiv(B, TB),)

    # (TB, IN) and (TB, 1) f32 blocks lane-pad to (TB, 128) in VMEM; size the
    # scoped VMEM limit for the double-buffered input + output tiles.
    rows_p = ((TB + 7) // 8) * 8
    buf_bytes = rows_p * 128 * 4
    vmem_limit = min(64 * 1024 * 1024,
                     max(32 * 1024 * 1024, 4 * buf_bytes + 8 * 1024 * 1024))

    # "parallel" everywhere; CORE_PARALLEL splits batch tiles across the two
    # TensorCores of a v7x chip when explicitly requested.
    batch_sem = pltpu.CORE_PARALLEL if core_parallel else "parallel"

    return pl.pallas_call(
        linear_kernel,
        out_shape=jax.ShapeDtypeStruct((B, OUT), x.dtype),
        grid_spec=pltpu.PrefetchScalarGridSpec(
            num_scalar_prefetch=0,
            grid=grid,
            in_specs=[
                pl.BlockSpec((TB, IN), lambda i: (i, 0)),            # streamed batch tile
                pl.BlockSpec((OUT, IN), lambda i: (0, 0)),           # resident weight row
                pl.BlockSpec(memory_space=pltpu.MemorySpace.SMEM),   # scalar bias
            ],
            out_specs=pl.BlockSpec((TB, OUT), lambda i: (i, 0)),
        ),
        compiler_params=pltpu.CompilerParams(
            dimension_semantics=(batch_sem,),
            vmem_limit_bytes=vmem_limit,
        ),
    )(x, w, b)


class SimpleModelPallas:
    """JAX/Pallas equivalent of:
        self.fc = nn.Linear(10, 1); forward(x) = self.fc(x)
    """

    def __init__(self, key, in_features=10, out_features=1):
        k_w, k_b = jax.random.split(key)
        # PyTorch nn.Linear default init: U(-1/sqrt(fan_in), 1/sqrt(fan_in))
        bound = 1.0 / (in_features ** 0.5)
        # Keep the PyTorch [out, in] weight layout directly (no transpose needed).
        self.w = jax.random.uniform(
            k_w, (out_features, in_features), jnp.float32, -bound, bound
        )
        self.b = jax.random.uniform(
            k_b, (out_features,), jnp.float32, -bound, bound
        ).reshape(1, out_features)                 # (1, 1) scalar for SMEM

    def __call__(self, x):
        return linear_pallas(x, self.w, self.b)


if __name__ == "__main__":
    key = jax.random.PRNGKey(0)
    k_model, k_x, k_x2 = jax.random.split(key, 3)

    batch = 8
    in_features = 10
    model = SimpleModelPallas(k_model, in_features=in_features, out_features=1)

    # Small example consistent with the module (nn.Linear(10, 1)).
    x = jax.random.normal(k_x, (batch, in_features), dtype=jnp.float32)
    out = jax.block_until_ready(model(x))
    ref = x @ model.w.T + model.b
    assert out.shape == (batch, 1)
    assert jnp.allclose(out, ref, atol=1e-5, rtol=1e-5)

    # Also exercise the multi-tile pipelined path with a masked edge block.
    big_batch = 20000
    x2 = jax.random.normal(k_x2, (big_batch, in_features), dtype=jnp.float32)
    out2 = jax.block_until_ready(model(x2))
    ref2 = x2 @ model.w.T + model.b
    assert out2.shape == (big_batch, 1)
    assert jnp.allclose(out2, ref2, atol=1e-4, rtol=1e-4)

    print("KERNEL_OK")
</pallas_src>

<mosaic_0001>
module attributes {stable_mosaic.version = 11 : i64} {
  func.func @linear_kernel(%arg0: i32, %arg1: memref<8x10xf32, #tpu.memory_space<vmem>>, %arg2: memref<1x10xf32, #tpu.memory_space<vmem>>, %arg3: memref<1x1xf32, #tpu.memory_space<smem>>, %arg4: memref<8x1xf32, #tpu.memory_space<vmem>>) attributes {dimension_semantics = [#tpu.dimension_semantics<parallel>], iteration_bounds = array<i64: 1>, scalar_prefetch = 0 : i64, scratch_operands = 0 : i64, tpu.core_type = #tpu.core_type<tc>, window_params = [{transform_indices = @transform_0, window_bounds = array<i64: 8, 10>}, {pipeline_mode = #tpu.pipeline_mode<synchronous>, transform_indices = @transform_1, window_bounds = array<i64: 1, 10>}, {transform_indices = @transform_2, window_bounds = array<i64: 1, 1>}, {transform_indices = @transform_3, window_bounds = array<i64: 8, 1>}]} {
    %c0 = arith.constant 0 : index
    %c0_0 = arith.constant 0 : index
    %0 = vector.load %arg1[%c0, %c0_0] : memref<8x10xf32, #tpu.memory_space<vmem>>, vector<8x10xf32>
    %c0_1 = arith.constant 0 : index
    %c0_2 = arith.constant 0 : index
    %1 = vector.load %arg2[%c0_1, %c0_2] : memref<1x10xf32, #tpu.memory_space<vmem>>, vector<1x10xf32>
    %2 = vector.broadcast %1 : vector<1x10xf32> to vector<8x10xf32>
    %3 = arith.mulf %0, %2 : vector<8x10xf32>
    %cst = arith.constant dense<0.000000e+00> : vector<8xf32>
    %4 = vector.multi_reduction <add>, %3, %cst [1] : vector<8x10xf32> to vector<8xf32>
    %5 = vector.shape_cast %4 : vector<8xf32> to vector<8x1xf32>
    %c0_3 = arith.constant 0 : index
    %c0_4 = arith.constant 0 : index
    %6 = memref.load %arg3[%c0_3, %c0_4] : memref<1x1xf32, #tpu.memory_space<smem>>
    %7 = vector.broadcast %6 : f32 to vector<8x1xf32>
    %8 = arith.addf %5, %7 : vector<8x1xf32>
    %c0_5 = arith.constant 0 : index
    %c0_6 = arith.constant 0 : index
    %9 = vector.load %arg4[%c0_5, %c0_6] : memref<8x1xf32, #tpu.memory_space<vmem>>, vector<8x1xf32>
    tpu.vector_store %arg4[%c0_5, %c0_6], %8 {strides = array<i32>} : memref<8x1xf32, #tpu.memory_space<vmem>>, vector<8x1xf32>,
    return
  }
  func.func @transform_0(%arg0: i32) -> (i32, i32) {
    %c0_i32 = arith.constant 0 : i32
    %c0_i32_0 = arith.constant 0 : i32
    return %arg0, %c0_i32 : i32, i32
  }
  func.func @transform_1(%arg0: i32) -> (i32, i32) {
    %c0_i32 = arith.constant 0 : i32
    %c0_i32_0 = arith.constant 0 : i32
    %c0_i32_1 = arith.constant 0 : i32
    return %c0_i32, %c0_i32_0 : i32, i32
  }
  func.func @transform_2(%arg0: i32) -> (i32, i32) {
    %c0_i32 = arith.constant 0 : i32
    %c0_i32_0 = arith.constant 0 : i32
    %c0_i32_1 = arith.constant 0 : i32
    return %c0_i32, %c0_i32_0 : i32, i32
  }
  func.func @transform_3(%arg0: i32) -> (i32, i32) {
    %c0_i32 = arith.constant 0 : i32
    %c0_i32_0 = arith.constant 0 : i32
    return %arg0, %c0_i32 : i32, i32
  }
}

</mosaic_0001>

<llo_original>
// kernel: linear_pallas.1
$region0: #{linear_pallas.1}
  #allocation0 [shape = 'u32[]', space=smem, size = 0x4, offset = 0x4, fixed_abs, tag = 'smem constant byte address 0x4 - core index']
  #allocation1 [shape = 'u32[144,128]{1,0:T(1,128)}', space=vmem, size = 0x12000, scoped, tag = 'internal scratch']
  #allocation2 [shape = 'f32[1,1]{1,0:T(1,128)S(6)}', space=smem, size = 0x200, scoped, tag = 'scoped memory for linear_pallas.1']
  %s0 = inlined_call_operand.hbm [shape: f32[8,10], index: 0, kind: input, shape index: {}]
  %s1 = inlined_call_operand.vmem [shape: f32[1,10], index: 1, kind: input, shape index: {}]
  %s2 = inlined_call_operand.<no memory space> [shape: f32[1,1], index: 2, kind: input, shape index: {}]
  %s3 = inlined_call_operand.vmem [shape: f32[8,1], index: 3, kind: output, shape index: {}]
  %s4 = sld [smem:[#allocation0]]
  $region26: #{linear_pallas.1} parent=0
    _
  %s6 = ssub.s32 1, %s4
  %s7 = scalar_select 0, %s6, %s4
  %8 = sst [smem:[#allocation2]] %s2
  $region1: #{linear_pallas.1} parent=0
    #allocation3 [shape = 'u8[4096]{0}', space=vmem, size = 0x1000, scoped, tag = 'input window, operand 0, single buffered']
    #allocation4 [shape = 's32[1]{0}', space=sflag, size = 0x4, scoped, tag = 'scoped memory for linear_pallas.1']
    %9 = vsyncpa [#allocation4], 0
    // Predicated region
    $region2: #{linear_pallas.1} parent=1 // pred_check
      _
    $region3: #{linear_pallas.1} parent=1 // pred_check_branch
      %11 = sbr.rel (0) target = $region5
    $region4: #{linear_pallas.1} parent=1 // pred_region
      %s13 = ssub.s32 128, 128
      %14 = vsyncadd [#allocation4], %s13
      %s16 = sshll.u32 [#allocation3], 4
      %s17 = int_to_ptr.vmem [resolvable:$true] %s16
      %19 = dma.hbm_to_vmem [thread:$0]  %s0, 128, %s17, [#allocation4]
    $region5: #{linear_pallas.1} parent=1 // pred_fallthru
      _
    // Predicated region
    $region6: #{linear_pallas.1} parent=1 // pred_check
      _
    $region7: #{linear_pallas.1} parent=1 // pred_check_branch
      %21 = sbr.rel (0) target = $region9
    $region8: #{linear_pallas.1} parent=1 // pred_region
      _
    $region9: #{linear_pallas.1} parent=1 // pred_fallthru
      _
    // Predicated region
    $region10: #{linear_pallas.1} parent=1 // pred_check
      _
    $region11: #{linear_pallas.1} parent=1 // pred_check_branch
      %23 = sbr.rel (0) target = $region13
    $region12: #{linear_pallas.1} parent=1 // pred_region
      _
    $region13: #{linear_pallas.1} parent=1 // pred_fallthru
      _
    // Predicated region
    $region14: #{linear_pallas.1} parent=1 // pred_check
      _
    $region15: #{linear_pallas.1} parent=1 // pred_check_branch
      %25 = sbr.rel (0) target = $region17
    $region16: #{linear_pallas.1} parent=1 // pred_region
      %26 = dma.done [#allocation4], 128
    $region17: #{linear_pallas.1} parent=1 // pred_fallthru
      _
    %v27 = vld [vmem:[#allocation3] sm:$0xff]
    %v28 = vld [vmem:[%s1] sm:$0x1]
    %v30 = vlaneseq
    %v31 = vshrl.u32 %v30, 7
    %v32 = vsub.s32 0, %v31
    %v33 = vrot.slane %v28, %v32
    %v35 = vmul.f32 %v27, %v33
    %vm36 = vcmask 80896
    %v37 = vsel %vm36, %v35, 0.0
    %38 = vadd.xlane.f32.xlu0 %v37
    %v39 = vpop.xlane.xlu0 %38
    %s40 = sld [smem:[#allocation2]]
    %v41 = vstv %s40
    %v42 = vadd.f32 %v39, %v41
    %vm43 = vcmask 7168
    %44 = vst.msk [vmem:[%s3] sm:$0xff] %vm43, %v42
    // Predicated region
    $region18: #{linear_pallas.1} parent=1 // pred_check
      _
    $region19: #{linear_pallas.1} parent=1 // pred_check_branch
      %46 = sbr.rel (0) target = $region21
    $region20: #{linear_pallas.1} parent=1 // pred_region
      _
    $region21: #{linear_pallas.1} parent=1 // pred_fallthru
      _
    // Predicated region
    $region22: #{linear_pallas.1} parent=1 // pred_check
      _
    $region23: #{linear_pallas.1} parent=1 // pred_check_branch
      %48 = sbr.rel (0) target = $region25
    $region24: #{linear_pallas.1} parent=1 // pred_region
      _
    $region25: #{linear_pallas.1} parent=1 // pred_fallthru
      _
    %49 = vsyncpa [#allocation4], 1

</llo_original>
